<compile_context>
chip_gen: v7x
topology: tpu7x:2x2x1
jax: 0.10.0
libtpu: 0.0.40
codegen_flags: <defaults>
</compile_context>

<pallas_src>
import functools

import jax
import jax.numpy as jnp
from jax.experimental import pallas as pl
from jax.experimental.pallas import tpu as pltpu

N_JOINTS = 24
OUT_W = 80            # 72 abs lanes + 3 pred lanes + 5 pad lanes -> one lane-dense slab


def _trajectory_kernel(x_ref, w1a_ref, b1a_ref, w2a_ref, b2a_ref, lmat_ref,
                       out_ref, carry_ref):
    block_b, block_t, d_in = x_ref.shape
    out_w = out_ref.shape[-1]

    x2 = x_ref[...].reshape(block_b * block_t, d_in)

    # Fused matmul 1: [sel80 | w1].  Lanes 0..79 = rot_pos slab (no bias),
    # lanes 80.. = pre-activation hidden.
    y1 = jnp.dot(x2, w1a_ref[...], preferred_element_type=jnp.float32) + b1a_ref[...]
    rot = y1[:, :out_w].reshape(block_b, block_t, out_w)

    # Fused matmul 2: zero rows kill the rot lanes; hidden rows produce
    # [tiled root_v (0..71) | root_v (72..74) | 0 (75..79)].
    y2 = jnp.dot(jnp.maximum(y1, 0.0), w2a_ref[...],
                 preferred_element_type=jnp.float32) + b2a_ref[...]
    v = y2.reshape(block_b, block_t, out_w)

    # Within-chunk inclusive prefix sum over time: tiny batched triangular matmul.
    cum = jnp.einsum('bst,bte->bse', lmat_ref[...], v,
                     preferred_element_type=jnp.float32)

    # Cross-chunk carry.  carry = -v[t=0] at chunk 0 makes (carry + inclusive cumsum)
    # equal the strictly-causal sum_{1<=i<=t} root_v[i] of the reference.
    @pl.when(pl.program_id(1) == 0)
    def _():
        carry_ref[...] = -v[:, 0, :]

    trans = carry_ref[...][:, None, :] + cum                  # (block_b, block_t, 80)
    carry_ref[...] = carry_ref[...] + cum[:, block_t - 1, :]  # chunk total -> next chunk

    lane = jax.lax.broadcasted_iota(jnp.int32, (1, 1, out_w), 2)
    out_ref[...] = (rot + jnp.where(lane < N_JOINTS * 3, trans, v)).astype(out_ref.dtype)


def _pick_blocks(bs, T):
    """Pick (block_b, block_t): block_t | T (multiple of 8 when chunking), block_b | bs.

    Targets >= 4 total grid steps (DMA/compute overlap on single-TC v5e/v6e), an even
    number of batch blocks (v7x 2-TC balance), and <= ~512 rows per step so the
    per-chunk triangular matmul and intermediates stay small.
    """
    if T <= 128:
        block_t = T
    else:
        block_t = None
        for bt in range(128, 7, -8):
            if T % bt == 0:
                block_t = bt
                break
        if block_t is None:
            block_t = T  # TODO(synk): pad awkward sequence lengths instead of one big chunk
    nt = T // block_t

    divisors = [d for d in range(1, bs + 1) if bs % d == 0]
    cands = [d for d in divisors if d * block_t <= 512] or [1]

    def steps(d):
        return (bs // d) * nt

    best = None
    for want_steps, want_even in ((4, True), (4, False), (2, True), (2, False), (1, False)):
        sel = [d for d in cands
               if steps(d) >= want_steps and (not want_even or (bs // d) % 2 == 0)]
        if sel:
            best = max(sel)
            break
    return best, block_t


@functools.partial(jax.jit, static_argnames=("_blocks",))
def trajectory_forward(x, w1, b1, w2, b2, *, _blocks=None):
    """x: (bs, T, 24*n_dim). Returns (pred_root_v (bs,T,3), absolute_rot_pos (bs,T,24,3))."""
    bs, T, d_in = x.shape
    n_dim = d_in // N_JOINTS
    assert d_in == N_JOINTS * n_dim and n_dim >= 3
    hidden = w1.shape[1]

    if _blocks is None:
        block_b, block_t = _pick_blocks(bs, T)
    else:
        block_b, block_t = _blocks
    assert bs % block_b == 0 and T % block_t == 0
    assert block_t % 8 == 0 or block_t == T
    nb, nt = bs // block_b, T // block_t
    w1c = OUT_W + hidden

    f32 = jnp.float32
    # sel80: scatter each joint's (x, y, z) into output lanes 0..71 (lanes 72..79 zero).
    rows = (jnp.arange(N_JOINTS)[:, None] * n_dim + jnp.arange(3)[None, :]).reshape(-1)
    cols = jnp.arange(N_JOINTS * 3)
    sel80 = jnp.zeros((d_in, OUT_W), f32).at[rows, cols].set(1.0)

    # Fused weight slabs (built once in the wrapper, resident constants in the kernel).
    w1a = jnp.concatenate([sel80, w1.astype(f32)], axis=1)                 # (d_in, 80+hid)
    b1a = jnp.concatenate([jnp.zeros((1, OUT_W), f32),
                           b1.reshape(1, hidden).astype(f32)], axis=1)     # (1, 80+hid)

    rep = jnp.tile(jnp.eye(3, dtype=f32), (1, N_JOINTS))                   # (3, 72)
    w2f = w2.astype(f32)
    b2f = b2.reshape(1, 3).astype(f32)
    w2top = jnp.concatenate([w2f @ rep, w2f, jnp.zeros((hidden, OUT_W - 75), f32)], axis=1)
    w2a = jnp.concatenate([jnp.zeros((OUT_W, OUT_W), f32), w2top], axis=0)  # (80+hid, 80)
    b2a = jnp.concatenate([b2f @ rep, b2f, jnp.zeros((1, OUT_W - 75), f32)], axis=1)

    # Per-chunk inclusive triangular matrix, pre-broadcast over the batch block.
    tri = (jnp.arange(block_t)[:, None] >= jnp.arange(block_t)[None, :]).astype(f32)
    lmat = jnp.broadcast_to(tri[None], (block_b, block_t, block_t))

    rows_per_step = block_b * block_t
    vmem_bytes = 4 * (2 * rows_per_step * d_in + 2 * rows_per_step * OUT_W
                      + 2 * (d_in * w1c + w1c + w1c * OUT_W + OUT_W
                             + block_b * block_t * block_t)
                      + block_b * OUT_W + 8 * rows_per_step * 128)
    vmem_limit = int(min(max(2 * vmem_bytes, 16 << 20), 32 << 20))

    out = pl.pallas_call(
        _trajectory_kernel,
        out_shape=jax.ShapeDtypeStruct((bs, T, OUT_W), x.dtype),
        grid_spec=pltpu.PrefetchScalarGridSpec(
            num_scalar_prefetch=0,
            grid=(nb, nt),
            in_specs=[
                pl.BlockSpec((block_b, block_t, d_in), lambda b, t: (b, t, 0)),   # x
                pl.BlockSpec((d_in, w1c), lambda b, t: (0, 0)),                   # [sel|w1]
                pl.BlockSpec((1, w1c), lambda b, t: (0, 0)),                      # [0 |b1]
                pl.BlockSpec((w1c, OUT_W), lambda b, t: (0, 0)),                  # [0;w2']
                pl.BlockSpec((1, OUT_W), lambda b, t: (0, 0)),                    # b2'
                pl.BlockSpec((block_b, block_t, block_t), lambda b, t: (0, 0, 0)),  # tri
            ],
            out_specs=pl.BlockSpec((block_b, block_t, OUT_W), lambda b, t: (b, t, 0)),
            scratch_shapes=[pltpu.VMEM((block_b, OUT_W), jnp.float32)],           # carry
        ),
        compiler_params=pltpu.CompilerParams(
            dimension_semantics=("parallel", "arbitrary"),
            vmem_limit_bytes=vmem_limit),
    )(x, w1a, b1a, w2a, b2a, lmat)

    pred_root_v = out[..., 72:75]
    absolute_rot_pos = out[..., :72].reshape(bs, T, N_JOINTS, 3)
    return pred_root_v, absolute_rot_pos


def reference_forward(x, w1, b1, w2, b2):
    """Pure-JAX reference mirroring the PyTorch semantics."""
    bs, T, _ = x.shape
    rot_pos = x.reshape(bs, T, N_JOINTS, -1)[..., :3]
    h = jnp.maximum(x @ w1 + b1, 0.0)
    root_v = h @ w2 + b2                                   # (bs, T, 3)
    # root_trans[t] = sum_{i=1..t} root_v[i]  (torch loop starting at t_idx=1)
    root_trans = jnp.cumsum(root_v, axis=1) - root_v[:, :1, :]
    absolute = rot_pos + root_trans[:, :, None, :]
    return root_v, absolute


def _run_and_check(bs, T, n_dim, hidden, key, blocks=None):
    d_in = N_JOINTS * n_dim
    kx, k1, k2, k3, k4 = jax.random.split(key, 5)
    x = jax.random.normal(kx, (bs, T, d_in), dtype=jnp.float32)
    w1 = jax.random.normal(k1, (d_in, hidden), dtype=jnp.float32) * 0.05
    b1 = jax.random.normal(k2, (1, hidden), dtype=jnp.float32) * 0.01
    w2 = jax.random.normal(k3, (hidden, 3), dtype=jnp.float32) * 0.05
    b2 = jax.random.normal(k4, (1, 3), dtype=jnp.float32) * 0.01

    pred, absolute = jax.block_until_ready(
        trajectory_forward(x, w1, b1, w2, b2, _blocks=blocks))
    ref_pred, ref_abs = reference_forward(x, w1, b1, w2, b2)

    assert pred.shape == (bs, T, 3)
    assert absolute.shape == (bs, T, N_JOINTS, 3)
    assert jnp.allclose(pred, ref_pred, atol=1e-4, rtol=1e-4)
    assert jnp.allclose(absolute, ref_abs, atol=1e-4, rtol=1e-4)


if __name__ == "__main__":
    key = jax.random.PRNGKey(0)
    k_a, k_b = jax.random.split(key)

    # Primary small run: bs=2, T=8, n_dim=4 (rot_pos xyz + contact label), hidden=32.
    _run_and_check(bs=2, T=8, n_dim=4, hidden=32, key=k_a)

    # Exercise the multi-chunk carry + multi-sequence block path explicitly.
    _run_and_check(bs=4, T=16, n_dim=4, hidden=32, key=k_b, blocks=(2, 8))

    print("KERNEL_OK")
</pallas_src>

<mosaic_0001>
module attributes {stable_mosaic.version = 11 : i64} {
  func.func @_trajectory_kernel(%arg0: i32, %arg1: i32, %arg2: memref<1x8x96xf32, #tpu.memory_space<vmem>>, %arg3: memref<96x112xf32, #tpu.memory_space<vmem>>, %arg4: memref<1x112xf32, #tpu.memory_space<vmem>>, %arg5: memref<112x80xf32, #tpu.memory_space<vmem>>, %arg6: memref<1x80xf32, #tpu.memory_space<vmem>>, %arg7: memref<1x8x8xf32, #tpu.memory_space<vmem>>, %arg8: memref<1x8x80xf32, #tpu.memory_space<vmem>>, %arg9: memref<1x80xf32, #tpu.memory_space<vmem>>) attributes {dimension_semantics = [#tpu.dimension_semantics<parallel>, #tpu.dimension_semantics<arbitrary>], iteration_bounds = array<i64: 2, 1>, scalar_prefetch = 0 : i64, scratch_operands = 1 : i64, tpu.core_type = #tpu.core_type<tc>, window_params = [{transform_indices = @transform_0, window_bounds = array<i64: 1, 8, 96>}, {pipeline_mode = #tpu.pipeline_mode<synchronous>, transform_indices = @transform_1, window_bounds = array<i64: 96, 112>}, {pipeline_mode = #tpu.pipeline_mode<synchronous>, transform_indices = @transform_2, window_bounds = array<i64: 1, 112>}, {pipeline_mode = #tpu.pipeline_mode<synchronous>, transform_indices = @transform_3, window_bounds = array<i64: 112, 80>}, {pipeline_mode = #tpu.pipeline_mode<synchronous>, transform_indices = @transform_4, window_bounds = array<i64: 1, 80>}, {pipeline_mode = #tpu.pipeline_mode<synchronous>, transform_indices = @transform_5, window_bounds = array<i64: 1, 8, 8>}, {transform_indices = @transform_6, window_bounds = array<i64: 1, 8, 80>}]} {
    %c0 = arith.constant 0 : index
    %c0_0 = arith.constant 0 : index
    %c0_1 = arith.constant 0 : index
    %0 = vector.load %arg2[%c0, %c0_0, %c0_1] : memref<1x8x96xf32, #tpu.memory_space<vmem>>, vector<1x8x96xf32>
    %1 = vector.shape_cast %0 : vector<1x8x96xf32> to vector<8x96xf32>
    %c0_2 = arith.constant 0 : index
    %c0_3 = arith.constant 0 : index
    %2 = vector.load %arg3[%c0_2, %c0_3] : memref<96x112xf32, #tpu.memory_space<vmem>>, vector<96x112xf32>
    %cst = arith.constant dense<0.000000e+00> : vector<8x112xf32>
    %3 = tpu.matmul %1, %2, %cst {dimension_numbers = #tpu.dot_dimension_numbers<[1], [0], [0], [1], [0, 0, 1, 1], [], []>} : vector<8x96xf32>, vector<96x112xf32>, vector<8x112xf32> -> vector<8x112xf32>
    %c0_4 = arith.constant 0 : index
    %c0_5 = arith.constant 0 : index
    %4 = vector.load %arg4[%c0_4, %c0_5] : memref<1x112xf32, #tpu.memory_space<vmem>>, vector<1x112xf32>
    %5 = vector.broadcast %4 : vector<1x112xf32> to vector<8x112xf32>
    %6 = arith.addf %3, %5 : vector<8x112xf32>
    %7 = vector.extract_strided_slice %6 {offsets = [0, 0], sizes = [8, 80], strides = [1, 1]} : vector<8x112xf32> to vector<8x80xf32>
    %8 = vector.shape_cast %7 : vector<8x80xf32> to vector<1x8x80xf32>
    %cst_6 = arith.constant 0.000000e+00 : f32
    %9 = vector.broadcast %cst_6 : f32 to vector<8x112xf32>
    %10 = arith.maximumf %6, %9 : vector<8x112xf32>
    %c0_7 = arith.constant 0 : index
    %c0_8 = arith.constant 0 : index
    %11 = vector.load %arg5[%c0_7, %c0_8] : memref<112x80xf32, #tpu.memory_space<vmem>>, vector<112x80xf32>
    %cst_9 = arith.constant dense<0.000000e+00> : vector<8x80xf32>
    %12 = tpu.matmul %10, %11, %cst_9 {dimension_numbers = #tpu.dot_dimension_numbers<[1], [0], [0], [1], [0, 0, 1, 1], [], []>} : vector<8x112xf32>, vector<112x80xf32>, vector<8x80xf32> -> vector<8x80xf32>
    %c0_10 = arith.constant 0 : index
    %c0_11 = arith.constant 0 : index
    %13 = vector.load %arg6[%c0_10, %c0_11] : memref<1x80xf32, #tpu.memory_space<vmem>>, vector<1x80xf32>
    %14 = vector.broadcast %13 : vector<1x80xf32> to vector<8x80xf32>
    %15 = arith.addf %12, %14 : vector<8x80xf32>
    %16 = vector.shape_cast %15 : vector<8x80xf32> to vector<1x8x80xf32>
    %c0_12 = arith.constant 0 : index
    %c0_13 = arith.constant 0 : index
    %c0_14 = arith.constant 0 : index
    %17 = vector.load %arg7[%c0_12, %c0_13, %c0_14] : memref<1x8x8xf32, #tpu.memory_space<vmem>>, vector<1x8x8xf32>
    "tpu.trace_start"() <{level = 10 : i32, message = "bst,bte->bse"}> : () -> ()
    %cst_15 = arith.constant dense<0.000000e+00> : vector<1x8x80xf32>
    %18 = tpu.matmul %17, %16, %cst_15 {dimension_numbers = #tpu.dot_dimension_numbers<[2], [1], [1], [2], [0, 0, 0, 1, 1, 2], [0], [0]>} : vector<1x8x8xf32>, vector<1x8x80xf32>, vector<1x8x80xf32> -> vector<1x8x80xf32>
    "tpu.trace_stop"() : () -> ()
    %c0_i32 = arith.constant 0 : i32
    %19 = arith.cmpi eq, %arg1, %c0_i32 : i32
    %20 = arith.extui %19 : i1 to i32
    %c0_i32_16 = arith.constant 0 : i32
    %21 = arith.cmpi ne, %20, %c0_i32_16 : i32
    scf.if %21 {
      %39 = vector.extract_strided_slice %16 {offsets = [0, 0, 0], sizes = [1, 1, 80], strides = [1, 1, 1]} : vector<1x8x80xf32> to vector<1x1x80xf32>
      %40 = vector.shape_cast %39 : vector<1x1x80xf32> to vector<1x80xf32>
      %cst_26 = arith.constant 0.000000e+00 : f32
      %41 = vector.broadcast %cst_26 : f32 to vector<1x80xf32>
      %42 = arith.subf %41, %40 : vector<1x80xf32>
      %c0_27 = arith.constant 0 : index
      %c0_28 = arith.constant 0 : index
      %43 = vector.load %arg9[%c0_27, %c0_28] : memref<1x80xf32, #tpu.memory_space<vmem>>, vector<1x80xf32>
      tpu.vector_store %arg9[%c0_27, %c0_28], %42 {strides = array<i32>} : memref<1x80xf32, #tpu.memory_space<vmem>>, vector<1x80xf32>,
    } else {
    }
    %c0_17 = arith.constant 0 : index
    %c0_18 = arith.constant 0 : index
    %22 = vector.load %arg9[%c0_17, %c0_18] : memref<1x80xf32, #tpu.memory_space<vmem>>, vector<1x80xf32>
    %23 = vector.shape_cast %22 : vector<1x80xf32> to vector<1x1x80xf32>
    %24 = vector.broadcast %23 : vector<1x1x80xf32> to vector<1x8x80xf32>
    %25 = arith.addf %24, %18 : vector<1x8x80xf32>
    %c0_19 = arith.constant 0 : index
    %c0_20 = arith.constant 0 : index
    %26 = vector.load %arg9[%c0_19, %c0_20] : memref<1x80xf32, #tpu.memory_space<vmem>>, vector<1x80xf32>
    %27 = vector.extract_strided_slice %18 {offsets = [0, 7, 0], sizes = [1, 1, 80], strides = [1, 1, 1]} : vector<1x8x80xf32> to vector<1x1x80xf32>
    %28 = vector.shape_cast %27 : vector<1x1x80xf32> to vector<1x80xf32>
    %29 = arith.addf %26, %28 : vector<1x80xf32>
    %c0_21 = arith.constant 0 : index
    %c0_22 = arith.constant 0 : index
    %30 = vector.load %arg9[%c0_21, %c0_22] : memref<1x80xf32, #tpu.memory_space<vmem>>, vector<1x80xf32>
    tpu.vector_store %arg9[%c0_21, %c0_22], %29 {strides = array<i32>} : memref<1x80xf32, #tpu.memory_space<vmem>>, vector<1x80xf32>,
    %31 = tpu.iota {dimensions = array<i32: 2>} : vector<1x1x80xi32>
    %c72_i32 = arith.constant 72 : i32
    %32 = vector.broadcast %c72_i32 : i32 to vector<1x1x80xi32>
    %33 = arith.cmpi slt, %31, %32 : vector<1x1x80xi32>
    %34 = vector.shape_cast %33 : vector<1x1x80xi1> to vector<1x1x80xi1>
    %35 = vector.broadcast %34 : vector<1x1x80xi1> to vector<1x8x80xi1>
    %36 = arith.select %35, %25, %16 : vector<1x8x80xi1>, vector<1x8x80xf32>
    %37 = arith.addf %8, %36 : vector<1x8x80xf32>
    %c0_23 = arith.constant 0 : index
    %c0_24 = arith.constant 0 : index
    %c0_25 = arith.constant 0 : index
    %38 = vector.load %arg8[%c0_23, %c0_24, %c0_25] : memref<1x8x80xf32, #tpu.memory_space<vmem>>, vector<1x8x80xf32>
    tpu.vector_store %arg8[%c0_23, %c0_24, %c0_25], %37 {strides = array<i32>} : memref<1x8x80xf32, #tpu.memory_space<vmem>>, vector<1x8x80xf32>,
    return
  }
  func.func @transform_0(%arg0: i32, %arg1: i32) -> (i32, i32, i32) {
    %c0_i32 = arith.constant 0 : i32
    %c0_i32_0 = arith.constant 0 : i32
    return %arg0, %arg1, %c0_i32 : i32, i32, i32
  }
  func.func @transform_1(%arg0: i32, %arg1: i32) -> (i32, i32) {
    %c0_i32 = arith.constant 0 : i32
    %c0_i32_0 = arith.constant 0 : i32
    %c0_i32_1 = arith.constant 0 : i32
    return %c0_i32, %c0_i32_0 : i32, i32
  }
  func.func @transform_2(%arg0: i32, %arg1: i32) -> (i32, i32) {
    %c0_i32 = arith.constant 0 : i32
    %c0_i32_0 = arith.constant 0 : i32
    %c0_i32_1 = arith.constant 0 : i32
    return %c0_i32, %c0_i32_0 : i32, i32
  }
  func.func @transform_3(%arg0: i32, %arg1: i32) -> (i32, i32) {
    %c0_i32 = arith.constant 0 : i32
    %c0_i32_0 = arith.constant 0 : i32
    %c0_i32_1 = arith.constant 0 : i32
    return %c0_i32, %c0_i32_0 : i32, i32
  }
  func.func @transform_4(%arg0: i32, %arg1: i32) -> (i32, i32) {
    %c0_i32 = arith.constant 0 : i32
    %c0_i32_0 = arith.constant 0 : i32
    %c0_i32_1 = arith.constant 0 : i32
    return %c0_i32, %c0_i32_0 : i32, i32
  }
  func.func @transform_5(%arg0: i32, %arg1: i32) -> (i32, i32, i32) {
    %c0_i32 = arith.constant 0 : i32
    %c0_i32_0 = arith.constant 0 : i32
    %c0_i32_1 = arith.constant 0 : i32
    %c0_i32_2 = arith.constant 0 : i32
    return %c0_i32, %c0_i32_0, %c0_i32_1 : i32, i32, i32
  }
  func.func @transform_6(%arg0: i32, %arg1: i32) -> (i32, i32, i32) {
    %c0_i32 = arith.constant 0 : i32
    %c0_i32_0 = arith.constant 0 : i32
    return %arg0, %arg1, %c0_i32 : i32, i32, i32
  }
}

</mosaic_0001>

<llo_original>
// kernel: tile.9
$region0: #{tile.9}
  %s0 = inlined_call_operand.vmem [shape: f32[3,24,3], index: 0, kind: input, shape index: {}]
  %s1 = inlined_call_operand.vmem [shape: f32[3,72], index: 1, kind: output, shape index: {}]
  $region1: #{tile.9} parent=0
    #allocation0 [shape = 'u8[4096]{0}', space=vmem, size = 0x1000, scoped, tag = 'scoped mem for output reshape']
    %v2 = vld [vmem:[%s0] ss:$24 sm:$0x7]
    %vm3 = vcmask 23552
    %4 = vst.msk [vmem:[#allocation0] sm:$0x7] %vm3, %v2
    %s5 = scalar_lea.vmem %s0, 23
    %v6 = vld [vmem:[%s5] ss:$24 sm:$0x7]
    %7 = vrot.lane.b32.xlu0 %v6, 69
    %v8 = vpop.permute.xlu0 %7
    %vm9 = vcmask 589352
    %10 = vst.msk [vmem:[#allocation0] sm:$0x7] %vm9, %v8
    %s11 = scalar_lea.vmem %s0, 22
    %v12 = vld [vmem:[%s11] ss:$24 sm:$0x7]
    %13 = vrot.lane.b32.xlu0 %v12, 66
    %v14 = vpop.permute.xlu0 %13
    %vm15 = vcmask 564752
    %16 = vst.msk [vmem:[#allocation0] sm:$0x7] %vm15, %v14
    %s17 = scalar_lea.vmem %s0, 21
    %v18 = vld [vmem:[%s17] ss:$24 sm:$0x7]
    %19 = vrot.lane.b32.xlu0 %v18, 63
    %v20 = vpop.permute.xlu0 %19
    %vm21 = vcmask 540152
    %22 = vst.msk [vmem:[#allocation0] sm:$0x7] %vm21, %v20
    %s23 = scalar_lea.vmem %s0, 20
    %v24 = vld [vmem:[%s23] ss:$24 sm:$0x7]
    %25 = vrot.lane.b32.xlu0 %v24, 60
    %v26 = vpop.permute.xlu0 %25
    %vm27 = vcmask 515552
    %28 = vst.msk [vmem:[#allocation0] sm:$0x7] %vm27, %v26
    %s29 = scalar_lea.vmem %s0, 19
    %v30 = vld [vmem:[%s29] ss:$24 sm:$0x7]
    %31 = vrot.lane.b32.xlu0 %v30, 57
    %v32 = vpop.permute.xlu0 %31
    %vm33 = vcmask 490952
    %34 = vst.msk [vmem:[#allocation0] sm:$0x7] %vm33, %v32
    %s35 = scalar_lea.vmem %s0, 18
    %v36 = vld [vmem:[%s35] ss:$24 sm:$0x7]
    %37 = vrot.lane.b32.xlu0 %v36, 54
    %v38 = vpop.permute.xlu0 %37
    %vm39 = vcmask 466352
    %40 = vst.msk [vmem:[#allocation0] sm:$0x7] %vm39, %v38
    %s41 = scalar_lea.vmem %s0, 17
    %v42 = vld [vmem:[%s41] ss:$24 sm:$0x7]
    %43 = vrot.lane.b32.xlu0 %v42, 51
    %v44 = vpop.permute.xlu0 %43
    %vm45 = vcmask 441752
    %46 = vst.msk [vmem:[#allocation0] sm:$0x7] %vm45, %v44
    %s47 = scalar_lea.vmem %s0, 16
    %v48 = vld [vmem:[%s47] ss:$24 sm:$0x7]
    %49 = vrot.lane.b32.xlu0 %v48, 48
    %v50 = vpop.permute.xlu0 %49
    %vm51 = vcmask 417152
    %52 = vst.msk [vmem:[#allocation0] sm:$0x7] %vm51, %v50
    %s53 = scalar_lea.vmem %s0, 15
    %v54 = vld [vmem:[%s53] ss:$24 sm:$0x7]
    %55 = vrot.lane.b32.xlu0 %v54, 45
    %v56 = vpop.permute.xlu0 %55
    %vm57 = vcmask 392552
    %58 = vst.msk [vmem:[#allocation0] sm:$0x7] %vm57, %v56
    %s59 = scalar_lea.vmem %s0, 14
    %v60 = vld [vmem:[%s59] ss:$24 sm:$0x7]
    %61 = vrot.lane.b32.xlu0 %v60, 42
    %v62 = vpop.permute.xlu0 %61
    %vm63 = vcmask 367952
    %64 = vst.msk [vmem:[#allocation0] sm:$0x7] %vm63, %v62
    %s65 = scalar_lea.vmem %s0, 13
    %v66 = vld [vmem:[%s65] ss:$24 sm:$0x7]
    %67 = vrot.lane.b32.xlu0 %v66, 39
    %v68 = vpop.permute.xlu0 %67
    %vm69 = vcmask 343352
    %70 = vst.msk [vmem:[#allocation0] sm:$0x7] %vm69, %v68
    %s71 = scalar_lea.vmem %s0, 12
    %v72 = vld [vmem:[%s71] ss:$24 sm:$0x7]
    %73 = vrot.lane.b32.xlu0 %v72, 36
    %v74 = vpop.permute.xlu0 %73
    %vm75 = vcmask 318752
    %76 = vst.msk [vmem:[#allocation0] sm:$0x7] %vm75, %v74
    %s77 = scalar_lea.vmem %s0, 11
    %v78 = vld [vmem:[%s77] ss:$24 sm:$0x7]
    %79 = vrot.lane.b32.xlu0 %v78, 33
    %v80 = vpop.permute.xlu0 %79
    %vm81 = vcmask 294152
    %82 = vst.msk [vmem:[#allocation0] sm:$0x7] %vm81, %v80
    %s83 = scalar_lea.vmem %s0, 10
    %v84 = vld [vmem:[%s83] ss:$24 sm:$0x7]
    %85 = vrot.lane.b32.xlu0 %v84, 30
    %v86 = vpop.permute.xlu0 %85
    %vm87 = vcmask 269552
    %88 = vst.msk [vmem:[#allocation0] sm:$0x7] %vm87, %v86
    %s89 = scalar_lea.vmem %s0, 9
    %v90 = vld [vmem:[%s89] ss:$24 sm:$0x7]
    %91 = vrot.lane.b32.xlu0 %v90, 27
    %v92 = vpop.permute.xlu0 %91
    %vm93 = vcmask 244952
    %94 = vst.msk [vmem:[#allocation0] sm:$0x7] %vm93, %v92
    %s95 = scalar_lea.vmem %s0, 8
    %v96 = vld [vmem:[%s95] ss:$24 sm:$0x7]
    %97 = vrot.lane.b32.xlu0 %v96, 24
    %v98 = vpop.permute.xlu0 %97
    %vm99 = vcmask 220352
    %100 = vst.msk [vmem:[#allocation0] sm:$0x7] %vm99, %v98
    %s101 = scalar_lea.vmem %s0, 7
    %v102 = vld [vmem:[%s101] ss:$24 sm:$0x7]
    %103 = vrot.lane.b32.xlu0 %v102, 21
    %v104 = vpop.permute.xlu0 %103
    %vm105 = vcmask 195752
    %106 = vst.msk [vmem:[#allocation0] sm:$0x7] %vm105, %v104
    %s107 = scalar_lea.vmem %s0, 6
    %v108 = vld [vmem:[%s107] ss:$24 sm:$0x7]
    %109 = vrot.lane.b32.xlu0 %v108, 18
    %v110 = vpop.permute.xlu0 %109
    %vm111 = vcmask 171152
    %112 = vst.msk [vmem:[#allocation0] sm:$0x7] %vm111, %v110
    %s113 = scalar_lea.vmem %s0, 5
    %v114 = vld [vmem:[%s113] ss:$24 sm:$0x7]
    %115 = vrot.lane.b32.xlu0 %v114, 15
    %v116 = vpop.permute.xlu0 %115
    %vm117 = vcmask 146552
    %118 = vst.msk [vmem:[#allocation0] sm:$0x7] %vm117, %v116
    %s119 = scalar_lea.vmem %s0, 4
    %v120 = vld [vmem:[%s119] ss:$24 sm:$0x7]
    %121 = vrot.lane.b32.xlu0 %v120, 12
    %v122 = vpop.permute.xlu0 %121
    %vm123 = vcmask 121952
    %124 = vst.msk [vmem:[#allocation0] sm:$0x7] %vm123, %v122
    %s125 = scalar_lea.vmem %s0, 3
    %v126 = vld [vmem:[%s125] ss:$24 sm:$0x7]
    %127 = vrot.lane.b32.xlu0 %v126, 9
    %v128 = vpop.permute.xlu0 %127
    %vm129 = vcmask 97352
    %130 = vst.msk [vmem:[#allocation0] sm:$0x7] %vm129, %v128
    %s131 = scalar_lea.vmem %s0, 2
    %v132 = vld [vmem:[%s131] ss:$24 sm:$0x7]
    %133 = vrot.lane.b32.xlu0 %v132, 6
    %v134 = vpop.permute.xlu0 %133
    %vm135 = vcmask 72752
    %136 = vst.msk [vmem:[#allocation0] sm:$0x7] %vm135, %v134
    %s137 = scalar_lea.vmem %s0, 1
    %v138 = vld [vmem:[%s137] ss:$24 sm:$0x7]
    %139 = vrot.lane.b32.xlu0 %v138, 3
    %v140 = vpop.permute.xlu0 %139
    %vm141 = vcmask 48152
    %142 = vst.msk [vmem:[#allocation0] sm:$0x7] %vm141, %v140
    %s144 = sshllo.u32 0, 4
    %v146 = vld [vmem:[#allocation0] sm:%s144]
    %s147 = sshllo.u32 0, 4
    %148 = vst [vmem:[%s1] sm:%s147] %v146

// kernel: trajectory_forward.1
$region0: #{trajectory_forward.1}
  #allocation0 [shape = 'u32[]', space=smem, size = 0x4, offset = 0x4, fixed_abs, tag = 'smem constant byte address 0x4 - core index']
  #allocation1 [shape = 'u32[144,128]{1,0:T(1,128)}', space=vmem, size = 0x12000, scoped, tag = 'internal scratch']
  #allocation2 [shape = 'f32[1,80]{1,0:T(1,128)}', space=vmem, size = 0x200, scoped, tag = 'scratch operand']
  %s0 = inlined_call_operand.vmem [shape: f32[2,8,96], index: 0, kind: input, shape index: {}]
  %s1 = inlined_call_operand.vmem [shape: f32[96,112], index: 1, kind: input, shape index: {}]
  %s2 = inlined_call_operand.vmem [shape: f32[1,112], index: 2, kind: input, shape index: {}]
  %s3 = inlined_call_operand.vmem [shape: f32[112,80], index: 3, kind: input, shape index: {}]
  %s4 = inlined_call_operand.vmem [shape: f32[1,80], index: 4, kind: input, shape index: {}]
  %s5 = inlined_call_operand.vmem [shape: f32[1,8,8], index: 5, kind: input, shape index: {}]
  %s6 = inlined_call_operand.vmem [shape: f32[2,8,80], index: 6, kind: output, shape index: {}]
  %s7 = sld [smem:[#allocation0]]
  $region61: #{trajectory_forward.1} parent=0
    _
  %s9 = ssub.s32 1, %s7
  %s10 = scalar_select 0, %s9, %s7
  loop: start=0, step=1, limit=4
  $region2: #{trajectory_forward.1} parent=0 // loop_pre_header
    _
  $region3: #{trajectory_forward.1} parent=0 // loop_header
    %s12 = sphi 0, %s16
    %p13 = scmp.ge.s32.totalorder %s12, 4
    %s19 = sphi 0, %s31
    %s20 = sphi 0, %s27
    %s21 = sphi 0, %s19
    %s22 = sphi 0, %s20
    %s23 = sphi 0, %s21
    %s24 = sphi 0, %s22
    %s36 = sphi 0, %s38
    %s39 = sphi 0, %s36
    %s40 = sphi 0, %s39
    %s56 = sphi 0, %s40
    %s60 = sphi 0, %s60
    %s62 = sphi 0, %s60
    %s63 = sphi 0, %s62
    %s77 = sphi 0, %s63
    %s81 = sphi 0, %s81
    %s83 = sphi 0, %s81
    %s84 = sphi 0, %s83
    %s98 = sphi 0, %s84
    %s102 = sphi 0, %s102
    %s104 = sphi 0, %s102
    %s105 = sphi 0, %s104
    %s119 = sphi 0, %s105
    %s123 = sphi 0, %s123
    %s125 = sphi 0, %s123
    %s126 = sphi 0, %s125
    %s140 = sphi 0, %s126
    %s144 = sphi 0, %s144
    %s146 = sphi 0, %s144
    %s147 = sphi 0, %s146
    %s161 = sphi 0, %s147
    %s169 = sphi 0, %s171
    %s172 = sphi 0, %s169
    %s173 = sphi 0, %s172
    %s189 = sphi 0, %s173
  $region4: #{trajectory_forward.1} parent=0 // loop_header_branch
    %15 = sbr.rel (%p13) target = $region8
  $region5: #{trajectory_forward.1} parent=0 // loop_body
    %s17 = ssub.s32 %s12, 1
    %s18 = ssub.s32 %s12, 2
    %s25 = sadd.s32 1, %s20
    %p26 = scmp.ge.s32.totalorder %s25, 1
    %s27 = scalar_select %p26, 0, %s25
    %s28 = sadd.s32 1, %s19
    %s29 = scalar_select %p26, %s28, %s19
    %p30 = scmp.ge.s32.totalorder %s29, 2
    %s31 = scalar_select %p30, 0, %s29
    %s32 = ssub.s32 %s19, %s31
    %s33 = ssub.s32 %s20, %s27
    %s34 = sor.u32 %s32, %s33
    %p35 = scmp.eq.s32.totalorder %s34, 0
    %s37 = sadd.s32 %s36, 1
    %s38 = scalar_select %p35, %s36, %s37
    %p41 = pneg %p35
    %p42 = scmp.eq.s32.totalorder %s12, 1
    %p43 = por %p41, %p42
    %p44 = scmp.ne.s32.totalorder %s36, %s39
    %p45 = scmp.eq.s32.totalorder %s12, 0
    %p46 = por %p44, %p45
    %p47 = scmp.ne.s32.totalorder %s36, %s39
    %p48 = scmp.eq.s32.totalorder %s17, 1
    %p49 = por %p47, %p48
    %p50 = scmp.ne.s32.totalorder %s39, %s40
    %p51 = scmp.eq.s32.totalorder %s17, 0
    %p52 = por %p50, %p51
    %p53 = scmp.ne.s32.totalorder %s39, %s40
    %p54 = scmp.eq.s32.totalorder %s18, 1
    %p55 = por %p53, %p54
    %p57 = scmp.ne.s32.totalorder %s40, %s56
    %p58 = scmp.eq.s32.totalorder %s18, 0
    %p59 = por %p57, %p58
    %s61 = sadd.s32 %s60, 1
    %p64 = scmp.eq.s32.totalorder %s12, 1
    %p65 = scmp.ne.s32.totalorder %s60, %s62
    %p66 = scmp.eq.s32.totalorder %s12, 0
    %p67 = por %p65, %p66
    %p68 = scmp.ne.s32.totalorder %s60, %s62
    %p69 = scmp.eq.s32.totalorder %s17, 1
    %p70 = por %p68, %p69
    %p71 = scmp.ne.s32.totalorder %s62, %s63
    %p72 = scmp.eq.s32.totalorder %s17, 0
    %p73 = por %p71, %p72
    %p74 = scmp.ne.s32.totalorder %s62, %s63
    %p75 = scmp.eq.s32.totalorder %s18, 1
    %p76 = por %p74, %p75
    %p78 = scmp.ne.s32.totalorder %s63, %s77
    %p79 = scmp.eq.s32.totalorder %s18, 0
    %p80 = por %p78, %p79
    %s82 = sadd.s32 %s81, 1
    %p85 = scmp.eq.s32.totalorder %s12, 1
    %p86 = scmp.ne.s32.totalorder %s81, %s83
    %p87 = scmp.eq.s32.totalorder %s12, 0
    %p88 = por %p86, %p87
    %p89 = scmp.ne.s32.totalorder %s81, %s83
    %p90 = scmp.eq.s32.totalorder %s17, 1
    %p91 = por %p89, %p90
    %p92 = scmp.ne.s32.totalorder %s83, %s84
    %p93 = scmp.eq.s32.totalorder %s17, 0
    %p94 = por %p92, %p93
    %p95 = scmp.ne.s32.totalorder %s83, %s84
    %p96 = scmp.eq.s32.totalorder %s18, 1
    %p97 = por %p95, %p96
    %p99 = scmp.ne.s32.totalorder %s84, %s98
    %p100 = scmp.eq.s32.totalorder %s18, 0
    %p101 = por %p99, %p100
    %s103 = sadd.s32 %s102, 1
    %p106 = scmp.eq.s32.totalorder %s12, 1
    %p107 = scmp.ne.s32.totalorder %s102, %s104
    %p108 = scmp.eq.s32.totalorder %s12, 0
    %p109 = por %p107, %p108
    %p110 = scmp.ne.s32.totalorder %s102, %s104
    %p111 = scmp.eq.s32.totalorder %s17, 1
    %p112 = por %p110, %p111
    %p113 = scmp.ne.s32.totalorder %s104, %s105
    %p114 = scmp.eq.s32.totalorder %s17, 0
    %p115 = por %p113, %p114
    %p116 = scmp.ne.s32.totalorder %s104, %s105
    %p117 = scmp.eq.s32.totalorder %s18, 1
    %p118 = por %p116, %p117
    %p120 = scmp.ne.s32.totalorder %s105, %s119
    %p121 = scmp.eq.s32.totalorder %s18, 0
    %p122 = por %p120, %p121
    %s124 = sadd.s32 %s123, 1
    %p127 = scmp.eq.s32.totalorder %s12, 1
    %p128 = scmp.ne.s32.totalorder %s123, %s125
    %p129 = scmp.eq.s32.totalorder %s12, 0
    %p130 = por %p128, %p129
    %p131 = scmp.ne.s32.totalorder %s123, %s125
    %p132 = scmp.eq.s32.totalorder %s17, 1
    %p133 = por %p131, %p132
    %p134 = scmp.ne.s32.totalorder %s125, %s126
    %p135 = scmp.eq.s32.totalorder %s17, 0
    %p136 = por %p134, %p135
    %p137 = scmp.ne.s32.totalorder %s125, %s126
    %p138 = scmp.eq.s32.totalorder %s18, 1
    %p139 = por %p137, %p138
    %p141 = scmp.ne.s32.totalorder %s126, %s140
    %p142 = scmp.eq.s32.totalorder %s18, 0
    %p143 = por %p141, %p142
    %s145 = sadd.s32 %s144, 1
    %p148 = scmp.eq.s32.totalorder %s12, 1
    %p149 = scmp.ne.s32.totalorder %s144, %s146
    %p150 = scmp.eq.s32.totalorder %s12, 0
    %p151 = por %p149, %p150
    %p152 = scmp.ne.s32.totalorder %s144, %s146
    %p153 = scmp.eq.s32.totalorder %s17, 1
    %p154 = por %p152, %p153
    %p155 = scmp.ne.s32.totalorder %s146, %s147
    %p156 = scmp.eq.s32.totalorder %s17, 0
    %p157 = por %p155, %p156
    %p158 = scmp.ne.s32.totalorder %s146, %s147
    %p159 = scmp.eq.s32.totalorder %s18, 1
    %p160 = por %p158, %p159
    %p162 = scmp.ne.s32.totalorder %s147, %s161
    %p163 = scmp.eq.s32.totalorder %s18, 0
    %p164 = por %p162, %p163
    %s165 = ssub.s32 %s19, %s31
    %s166 = ssub.s32 %s20, %s27
    %s167 = sor.u32 %s165, %s166
    %p168 = scmp.eq.s32.totalorder %s167, 0
    %s170 = sadd.s32 %s169, 1
    %s171 = scalar_select %p168, %s169, %s170
    %p174 = pneg %p168
    %p175 = scmp.eq.s32.totalorder %s12, 1
    %p176 = por %p174, %p175
    %p177 = scmp.ne.s32.totalorder %s169, %s172
    %p178 = scmp.eq.s32.totalorder %s12, 0
    %p179 = por %p177, %p178
    %p180 = scmp.ne.s32.totalorder %s169, %s172
    %p181 = scmp.eq.s32.totalorder %s17, 1
    %p182 = por %p180, %p181
    %p183 = scmp.ne.s32.totalorder %s172, %s173
    %p184 = scmp.eq.s32.totalorder %s17, 0
    %p185 = por %p183, %p184
    %p186 = scmp.ne.s32.totalorder %s172, %s173
    %p187 = scmp.eq.s32.totalorder %s18, 1
    %p188 = por %p186, %p187
    %p190 = scmp.ne.s32.totalorder %s173, %s189
    %p191 = scmp.eq.s32.totalorder %s18, 0
    %p192 = por %p190, %p191
    %p193 = scmp.le.s32.totalorder 1, %s12
    %p194 = scmp.lt.s32.totalorder %s12, 3
    %p195 = pnand %p193, %p194
    %p196 = pneg %p195
    // Predicated region
    $region9: #{trajectory_forward.1} parent=5 // pred_check
      _
    $region10: #{trajectory_forward.1} parent=5 // pred_check_branch
      %198 = sbr.rel (%p195) target = $region12
    $region11: #{trajectory_forward.1} parent=5 // pred_region
      %s199 = ssub.s32 %s12, 1
      // Predicated region
      $region13: #{trajectory_forward.1} parent=11 // pred_check
        %p200 = pneg %p73
      $region14: #{trajectory_forward.1} parent=11 // pred_check_branch
        %202 = sbr.rel (%p200) target = $region16
      $region15: #{trajectory_forward.1} parent=11 // pred_region
        _
      $region16: #{trajectory_forward.1} parent=11 // pred_fallthru
        _
      // Predicated region
      $region17: #{trajectory_forward.1} parent=11 // pred_check
        %p203 = pneg %p94
      $region18: #{trajectory_forward.1} parent=11 // pred_check_branch
        %205 = sbr.rel (%p203) target = $region20
      $region19: #{trajectory_forward.1} parent=11 // pred_region
        _
      $region20: #{trajectory_forward.1} parent=11 // pred_fallthru
        _
      // Predicated region
      $region21: #{trajectory_forward.1} parent=11 // pred_check
        %p206 = pneg %p115
      $region22: #{trajectory_forward.1} parent=11 // pred_check_branch
        %208 = sbr.rel (%p206) target = $region24
      $region23: #{trajectory_forward.1} parent=11 // pred_region
        _
      $region24: #{trajectory_forward.1} parent=11 // pred_fallthru
        _
      // Predicated region
      $region25: #{trajectory_forward.1} parent=11 // pred_check
        %p209 = pneg %p136
      $region26: #{trajectory_forward.1} parent=11 // pred_check_branch
        %211 = sbr.rel (%p209) target = $region28
      $region27: #{trajectory_forward.1} parent=11 // pred_region
        _
      $region28: #{trajectory_forward.1} parent=11 // pred_fallthru
        _
      // Predicated region
      $region29: #{trajectory_forward.1} parent=11 // pred_check
        %p212 = pneg %p157
      $region30: #{trajectory_forward.1} parent=11 // pred_check_branch
        %214 = sbr.rel (%p212) target = $region32
      $region31: #{trajectory_forward.1} parent=11 // pred_region
        _
      $region32: #{trajectory_forward.1} parent=11 // pred_fallthru
        _
    $region12: #{trajectory_forward.1} parent=5 // pred_fallthru
      _
    %p215 = scmp.lt.s32.totalorder %s12, 2
    // Predicated region
    $region33: #{trajectory_forward.1} parent=5 // pred_check
      %p216 = pneg %p215
    $region34: #{trajectory_forward.1} parent=5 // pred_check_branch
      %218 = sbr.rel (%p216) target = $region36
    $region35: #{trajectory_forward.1} parent=5 // pred_region
      // Predicated region
      $region37: #{trajectory_forward.1} parent=35 // pred_check
        %p219 = pneg %p46
      $region38: #{trajectory_forward.1} parent=35 // pred_check_branch
        %221 = sbr.rel (%p219) target = $region40
      $region39: #{trajectory_forward.1} parent=35 // pred_region
        %p222 = scmp.lt.s32.totalorder %s19, 1
        %s223 = scalar_select %p222, %s19, 1
        %p224 = scmp.lt.s32.totalorder %s20, 0
        %s225 = scalar_select %p224, %s20, 0
        %s226 = sadd.s32 %s225, %s223
        %s227 = smul.addr %s226, 8
        %s228 = scalar_lea.vmem %s0, %s227
      $region40: #{trajectory_forward.1} parent=35 // pred_fallthru
        _
    $region36: #{trajectory_forward.1} parent=5 // pred_fallthru
      _
    %p229 = scmp.le.s32.totalorder 1, %s12
    %p230 = scmp.lt.s32.totalorder %s12, 3
    %p231 = pnand %p229, %p230
    %p232 = pneg %p231
    // Predicated region
    $region41: #{trajectory_forward.1} parent=5 // pred_check
      _
    $region42: #{trajectory_forward.1} parent=5 // pred_check_branch
      %234 = sbr.rel (%p231) target = $region44
    $region43: #{trajectory_forward.1} parent=5 // pred_region
      %s235 = ssub.s32 %s12, 1
      %p236 = scmp.lt.s32.totalorder %s21, 1
      %s237 = scalar_select %p236, %s21, 1
      %p238 = scmp.lt.s32.totalorder %s22, 0
      %s239 = scalar_select %p238, %s22, 0
      %s240 = sadd.s32 %s239, %s237
      %s241 = smul.addr %s240, 8
      %s242 = scalar_lea.vmem %s0, %s241
      %p243 = pneg %p52
      %p244 = pneg %p49
      %p245 = pneg %p73
      %p246 = pneg %p70
      %p247 = pneg %p94
      %p248 = pneg %p91
      %p249 = pneg %p115
      %p250 = pneg %p112
      %p251 = pneg %p136
      %p252 = pneg %p133
      %p253 = pneg %p157
      %p254 = pneg %p154
      %p255 = pneg %p185
      %p256 = pneg %p182
      %p257 = scmp.lt.s32.totalorder %s21, 1
      %s258 = scalar_select %p257, %s21, 1
      %p259 = scmp.lt.s32.totalorder %s22, 0
      %s260 = scalar_select %p259, %s22, 0
      %s261 = sadd.s32 %s260, %s258
      %s262 = smul.addr %s261, 8
      %s263 = scalar_lea.vmem %s6, %s262
      %p264 = scmp.lt.s32.totalorder %s21, 1
      %s265 = scalar_select %p264, %s21, 1
      %p266 = scmp.lt.s32.totalorder %s22, 0
      %s267 = scalar_select %p266, %s22, 0
      %s268 = sadd.s32 %s267, %s265
      %s269 = smul.addr %s268, 8
      %s270 = scalar_lea.vmem %s0, %s269
      %p271 = scmp.lt.s32.totalorder %s21, 1
      %s272 = scalar_select %p271, %s21, 1
      %p273 = scmp.lt.s32.totalorder %s22, 0
      %s274 = scalar_select %p273, %s22, 0
      %s275 = sadd.s32 %s274, %s272
      %s276 = smul.addr %s275, 8
      %s277 = scalar_lea.vmem %s6, %s276
      %v278 = vld [vmem:[%s270] sm:$0xff]
      %v279 = vld [vmem:[%s1] sm:$0xff]
      %v280 = vld [vmem:[%s1 + $0x8] sm:$0xff]
      %v281 = vld [vmem:[%s1 + $0x10] sm:$0xff]
      %v282 = vld [vmem:[%s1 + $0x18] sm:$0xff]
      %v283 = vld [vmem:[%s1 + $0x20] sm:$0xff]
      %v284 = vld [vmem:[%s1 + $0x28] sm:$0xff]
      %v285 = vld [vmem:[%s1 + $0x30] sm:$0xff]
      %v286 = vld [vmem:[%s1 + $0x38] sm:$0xff]
      %v287 = vld [vmem:[%s1 + $0x40] sm:$0xff]
      %v288 = vld [vmem:[%s1 + $0x48] sm:$0xff]
      %v289 = vld [vmem:[%s1 + $0x50] sm:$0xff]
      %v290 = vld [vmem:[%s1 + $0x58] sm:$0xff]
      %v291 = vld [vmem:[%s2] sm:$0x1]
      %v293 = vlaneseq
      %v294 = vshrl.u32 %v293, 7
      %v295 = vsub.s32 0, %v294
      %v296 = vrot.slane %v291, %v295
      %vm298 = vcmask 785408
      %v300 = vsel %vm298, %v278, 0
      %302 = vmatprep.subr.mxu0 0.0
      %303 = vmatpush1.msra.mxu0 %v279
      %304 = vmatprep.subr.mxu0 0.0
      %305 = vmatpush1.msra.mxu0 %v280
      %306 = vmatprep.subr.mxu0 0.0
      %307 = vmatpush1.msra.mxu0 %v281
      %308 = vmatprep.subr.mxu0 0.0
      %309 = vmatpush1.msra.mxu0 %v282
      %310 = vmatprep.subr.mxu0 0.0
      %311 = vmatpush1.msra.mxu0 %v283
      %312 = vmatprep.subr.mxu0 0.0
      %313 = vmatpush1.msra.mxu0 %v284
      %314 = vmatprep.subr.mxu0 0.0
      %315 = vmatpush1.msra.mxu0 %v285
      %316 = vmatprep.subr.mxu0 0.0
      %317 = vmatpush1.msra.mxu0 %v286
      %318 = vmatprep.subr.mxu0 0.0
      %319 = vmatpush1.msra.mxu0 %v287
      %320 = vmatprep.subr.mxu0 0.0
      %321 = vmatpush1.msra.mxu0 %v288
      %322 = vmatprep.subr.mxu0 0.0
      %323 = vmatpush1.msra.mxu0 %v289
      %324 = vmatprep.subr.mxu0 0.0
      %325 = vmatpush1.msra.mxu0 %v290
      %326 = vmatprep.subr.mxu0 0.0
      %327 = vmatpush1.msra.mxu0 0.0
      %328 = vmatprep.subr.mxu0 0.0
      %329 = vmatpush1.msra.mxu0 0.0
      %330 = vmatprep.subr.mxu0 0.0
      %331 = vmatpush1.msra.mxu0 0.0
      %332 = vmatprep.subr.mxu0 0.0
      %333 = vmatpush1.msra.mxu0 0.0
      %334 = vmatprep.subr.mxu0 0.0
      %335 = vmatpush1.msra.mxu0 0.0
      %336 = vmatprep.subr.mxu0 0.0
      %337 = vmatpush1.msra.mxu0 0.0
      %338 = vmatprep.subr.mxu0 0.0
      %339 = vmatpush1.msra.mxu0 0.0
      %340 = vmatprep.subr.mxu0 0.0
      %341 = vmatpush1.msra.mxu0 0.0
      %342 = vmatprep.subr.mxu0 0.0
      %343 = vmatpush1.msra.mxu0 0.0
      %344 = vmatprep.subr.mxu0 0.0
      %345 = vmatpush1.msra.mxu0 0.0
      %346 = vmatprep.subr.mxu0 0.0
      %347 = vmatpush1.msra.mxu0 0.0
      %348 = vmatprep.subr.mxu0 0.0
      %349 = vmatpush1.msra.mxu0 0.0
      %350 = vmatprep.subr.mxu0 0.0
      %351 = vmatpush1.msra.mxu0 0.0
      %352 = vmatprep.subr.mxu0 0.0
      %353 = vmatpush1.msra.mxu0 0.0
      %354 = vmatprep.subr.mxu0 0.0
      %355 = vmatpush1.msra.mxu0 0.0
      %356 = vmatprep.subr.mxu0 0.0
      %357 = vmatpush1.msra.mxu0 0.0
      %358 = vmatprep.subr.mxu0 0.0
      %359 = vmatpush1.msra.mxu0 0.0
      %360 = vmatprep.subr.mxu0 0.0
      %361 = vmatpush1.msra.mxu0 0.0
      %362 = vmatprep.subr.mxu0 0.0
      %363 = vmatpush1.msra.mxu0 0.0
      %364 = vmatprep.subr.mxu0 0.0
      %365 = vmatpush1.msra.mxu0 0.0
      %366 = vmatprep.mubr.f32.mxu0 0.0
      %367 = vmatmul.mubr.f32.gmra.mrb[0].mxu0 %v300
      %v368 = vpop.f32.mrb[0].mxu0
      %v369 = vadd.f32 %v296, %v368
      %v370 = vpop.f32.mrb[0].mxu0
      %371 = vdwg.mxu0
      %v372 = vmax.f32 %v369, 0.0
      %v373 = vld [vmem:[%s3] sm:$0xff]
      %v374 = vld [vmem:[%s3 + $0x8] sm:$0xff]
      %v375 = vld [vmem:[%s3 + $0x10] sm:$0xff]
      %v376 = vld [vmem:[%s3 + $0x18] sm:$0xff]
      %v377 = vld [vmem:[%s3 + $0x20] sm:$0xff]
      %v378 = vld [vmem:[%s3 + $0x28] sm:$0xff]
      %v379 = vld [vmem:[%s3 + $0x30] sm:$0xff]
      %v380 = vld [vmem:[%s3 + $0x38] sm:$0xff]
      %v381 = vld [vmem:[%s3 + $0x40] sm:$0xff]
      %v382 = vld [vmem:[%s3 + $0x48] sm:$0xff]
      %v383 = vld [vmem:[%s3 + $0x50] sm:$0xff]
      %v384 = vld [vmem:[%s3 + $0x58] sm:$0xff]
      %v385 = vld [vmem:[%s3 + $0x60] sm:$0xff]
      %v386 = vld [vmem:[%s3 + $0x68] sm:$0xff]
      %v387 = vld [vmem:[%s4] sm:$0x1]
      %v389 = vlaneseq
      %v390 = vshrl.u32 %v389, 7
      %v391 = vsub.s32 0, %v390
      %v392 = vrot.slane %v387, %v391
      %vm394 = vcmask 916480
      %v396 = vsel %vm394, %v372, 0
      %398 = vmatprep.subr.mxu0 0.0
      %399 = vmatpush1.msra.mxu0 %v373
      %400 = vmatprep.subr.mxu0 0.0
      %401 = vmatpush1.msra.mxu0 %v374
      %402 = vmatprep.subr.mxu0 0.0
      %403 = vmatpush1.msra.mxu0 %v375
      %404 = vmatprep.subr.mxu0 0.0
      %405 = vmatpush1.msra.mxu0 %v376
      %406 = vmatprep.subr.mxu0 0.0
      %407 = vmatpush1.msra.mxu0 %v377
      %408 = vmatprep.subr.mxu0 0.0
      %409 = vmatpush1.msra.mxu0 %v378
      %410 = vmatprep.subr.mxu0 0.0
      %411 = vmatpush1.msra.mxu0 %v379
      %412 = vmatprep.subr.mxu0 0.0
      %413 = vmatpush1.msra.mxu0 %v380
      %414 = vmatprep.subr.mxu0 0.0
      %415 = vmatpush1.msra.mxu0 %v381
      %416 = vmatprep.subr.mxu0 0.0
      %417 = vmatpush1.msra.mxu0 %v382
      %418 = vmatprep.subr.mxu0 0.0
      %419 = vmatpush1.msra.mxu0 %v383
      %420 = vmatprep.subr.mxu0 0.0
      %421 = vmatpush1.msra.mxu0 %v384
      %422 = vmatprep.subr.mxu0 0.0
      %423 = vmatpush1.msra.mxu0 %v385
      %424 = vmatprep.subr.mxu0 0.0
      %425 = vmatpush1.msra.mxu0 %v386
      %426 = vmatprep.subr.mxu0 0.0
      %427 = vmatpush1.msra.mxu0 0.0
      %428 = vmatprep.subr.mxu0 0.0
      %429 = vmatpush1.msra.mxu0 0.0
      %430 = vmatprep.subr.mxu0 0.0
      %431 = vmatpush1.msra.mxu0 0.0
      %432 = vmatprep.subr.mxu0 0.0
      %433 = vmatpush1.msra.mxu0 0.0
      %434 = vmatprep.subr.mxu0 0.0
      %435 = vmatpush1.msra.mxu0 0.0
      %436 = vmatprep.subr.mxu0 0.0
      %437 = vmatpush1.msra.mxu0 0.0
      %438 = vmatprep.subr.mxu0 0.0
      %439 = vmatpush1.msra.mxu0 0.0
      %440 = vmatprep.subr.mxu0 0.0
      %441 = vmatpush1.msra.mxu0 0.0
      %442 = vmatprep.subr.mxu0 0.0
      %443 = vmatpush1.msra.mxu0 0.0
      %444 = vmatprep.subr.mxu0 0.0
      %445 = vmatpush1.msra.mxu0 0.0
      %446 = vmatprep.subr.mxu0 0.0
      %447 = vmatpush1.msra.mxu0 0.0
      %448 = vmatprep.subr.mxu0 0.0
      %449 = vmatpush1.msra.mxu0 0.0
      %450 = vmatprep.subr.mxu0 0.0
      %451 = vmatpush1.msra.mxu0 0.0
      %452 = vmatprep.subr.mxu0 0.0
      %453 = vmatpush1.msra.mxu0 0.0
      %454 = vmatprep.subr.mxu0 0.0
      %455 = vmatpush1.msra.mxu0 0.0
      %456 = vmatprep.subr.mxu0 0.0
      %457 = vmatpush1.msra.mxu0 0.0
      %458 = vmatprep.subr.mxu0 0.0
      %459 = vmatpush1.msra.mxu0 0.0
      %460 = vmatprep.subr.mxu0 0.0
      %461 = vmatpush1.msra.mxu0 0.0
      %462 = vmatprep.mubr.f32.mxu0 0.0
      %463 = vmatmul.mubr.f32.gmra.mrb[0].mxu0 %v396
      %v464 = vpop.f32.mrb[0].mxu0
      %v465 = vadd.f32 %v392, %v464
      %v466 = vpop.f32.mrb[0].mxu0
      %467 = vdwg.mxu0
      %v468 = vld [vmem:[%s5] sm:$0xff]
      %vm469 = vcmask 64512
      %v471 = vsel %vm469, %v468, 0
      %473 = vmatprep.subr.mxu0 0.0
      %474 = vmatpush1.msra.mxu0 %v465
      %475 = vmatprep.subr.mxu0 0.0
      %476 = vmatpush1.msra.mxu0 0.0
      %477 = vmatprep.subr.mxu0 0.0
      %478 = vmatpush1.msra.mxu0 0.0
      %479 = vmatprep.subr.mxu0 0.0
      %480 = vmatpush1.msra.mxu0 0.0
      %481 = vmatprep.subr.mxu0 0.0
      %482 = vmatpush1.msra.mxu0 0.0
      %483 = vmatprep.subr.mxu0 0.0
      %484 = vmatpush1.msra.mxu0 0.0
      %485 = vmatprep.subr.mxu0 0.0
      %486 = vmatpush1.msra.mxu0 0.0
      %487 = vmatprep.subr.mxu0 0.0
      %488 = vmatpush1.msra.mxu0 0.0
      %489 = vmatprep.subr.mxu0 0.0
      %490 = vmatpush1.msra.mxu0 0.0
      %491 = vmatprep.subr.mxu0 0.0
      %492 = vmatpush1.msra.mxu0 0.0
      %493 = vmatprep.subr.mxu0 0.0
      %494 = vmatpush1.msra.mxu0 0.0
      %495 = vmatprep.subr.mxu0 0.0
      %496 = vmatpush1.msra.mxu0 0.0
      %497 = vmatprep.subr.mxu0 0.0
      %498 = vmatpush1.msra.mxu0 0.0
      %499 = vmatprep.subr.mxu0 0.0
      %500 = vmatpush1.msra.mxu0 0.0
      %501 = vmatprep.subr.mxu0 0.0
      %502 = vmatpush1.msra.mxu0 0.0
      %503 = vmatprep.subr.mxu0 0.0
      %504 = vmatpush1.msra.mxu0 0.0
      %505 = vmatprep.subr.mxu0 0.0
      %506 = vmatpush1.msra.mxu0 0.0
      %507 = vmatprep.subr.mxu0 0.0
      %508 = vmatpush1.msra.mxu0 0.0
      %509 = vmatprep.subr.mxu0 0.0
      %510 = vmatpush1.msra.mxu0 0.0
      %511 = vmatprep.subr.mxu0 0.0
      %512 = vmatpush1.msra.mxu0 0.0
      %513 = vmatprep.subr.mxu0 0.0
      %514 = vmatpush1.msra.mxu0 0.0
      %515 = vmatprep.subr.mxu0 0.0
      %516 = vmatpush1.msra.mxu0 0.0
      %517 = vmatprep.subr.mxu0 0.0
      %518 = vmatpush1.msra.mxu0 0.0
      %519 = vmatprep.subr.mxu0 0.0
      %520 = vmatpush1.msra.mxu0 0.0
      %521 = vmatprep.subr.mxu0 0.0
      %522 = vmatpush1.msra.mxu0 0.0
      %523 = vmatprep.subr.mxu0 0.0
      %524 = vmatpush1.msra.mxu0 0.0
      %525 = vmatprep.subr.mxu0 0.0
      %526 = vmatpush1.msra.mxu0 0.0
      %527 = vmatprep.subr.mxu0 0.0
      %528 = vmatpush1.msra.mxu0 0.0
      %529 = vmatprep.subr.mxu0 0.0
      %530 = vmatpush1.msra.mxu0 0.0
      %531 = vmatprep.subr.mxu0 0.0
      %532 = vmatpush1.msra.mxu0 0.0
      %533 = vmatprep.subr.mxu0 0.0
      %534 = vmatpush1.msra.mxu0 0.0
      %535 = vmatprep.subr.mxu0 0.0
      %536 = vmatpush1.msra.mxu0 0.0
      %537 = vmatprep.mubr.f32.mxu0 0.0
      %538 = vmatmul.mubr.f32.gmra.mrb[0].mxu0 %v471
      %v539 = vpop.f32.mrb[0].mxu0
      %v540 = vadd.f32 0.0, %v539
      %v541 = vpop.f32.mrb[0].mxu0
      %542 = vdwg.mxu0
      %p543 = scmp.eq.s32.totalorder %s22, 0
      // Predicated region
      $region45: #{trajectory_forward.1} parent=43 // pred_check
        %p544 = pneg %p543
      $region46: #{trajectory_forward.1} parent=43 // pred_check_branch
        %546 = sbr.rel (%p544) target = $region48
      $region47: #{trajectory_forward.1} parent=43 // pred_region
        %v547 = vsub.f32 0.0, %v465
        %vm548 = vcmask 647168
        %549 = vst.msk [vmem:[#allocation2] sm:$0x1] %vm548, %v547
      $region48: #{trajectory_forward.1} parent=43 // pred_fallthru
        _
      %v550 = vld [vmem:[#allocation2] sm:$0x1]
      %v552 = vlaneseq
      %v553 = vshrl.u32 %v552, 7
      %v554 = vsub.s32 0, %v553
      %v555 = vrot.slane %v550, %v554
      %v557 = vadd.f32 %v555, %v540
      %v559 = vcombine.high %v540, %v540
      %v561 = vunpack.c.l.s4 1966171168
      %v562 = vunpack.c.0.s8 %v561
      %v563 = vlaneseq
      %v564 = vshrl.u32 %v563, 7
      %v565 = vsub.s32 %v562, %v564
      %v566 = vrot.slane %v559, %v565
      %v567 = vcombine.high %v566, %v566
      %v569 = vunpack.c.l.s4 1966171168
      %v570 = vunpack.c.0.s8 %v569
      %v571 = vlaneseq
      %v572 = vshrl.u32 %v571, 7
      %v573 = vsub.s32 %v570, %v572
      %v574 = vrot.slane %v567, %v573
      %v575 = vcombine.high %v574, %v574
      %v577 = vadd.f32 %v550, %v575
      %vm578 = vcmask 647168
      %579 = vst.msk [vmem:[#allocation2] sm:$0x1] %vm578, %v577
      %v580 = vlaneseq
      %v581 = vand.u32 %v580, 127
      %vm582 = vcmp.lt.s32.totalorder %v581, 72
      %v583 = vsel %vm582, 1, 0
      %vm584 = vcmp.eq.s32.totalorder %v583, 1
      %v585 = vsel %vm584, %v557, %v465
      %v586 = vadd.f32 %v369, %v585
      %vm587 = vcmask 654336
      %588 = vst.msk [vmem:[%s277] sm:$0xff] %vm587, %v586
      %p589 = scmp.lt.s32.totalorder %s21, 1
      %s590 = scalar_select %p589, %s21, 1
      %p591 = scmp.lt.s32.totalorder %s22, 0
      %s592 = scalar_select %p591, %s22, 0
      %s593 = sadd.s32 %s592, %s590
      %s594 = smul.addr %s593, 8
      %s595 = scalar_lea.vmem %s6, %s594
      // Predicated region
      $region49: #{trajectory_forward.1} parent=43 // pred_check
        %p596 = pneg %p182
      $region50: #{trajectory_forward.1} parent=43 // pred_check_branch
        %598 = sbr.rel (%p596) target = $region52
      $region51: #{trajectory_forward.1} parent=43 // pred_region
        _
      $region52: #{trajectory_forward.1} parent=43 // pred_fallthru
        _
    $region44: #{trajectory_forward.1} parent=5 // pred_fallthru
      _
    %p599 = scmp.le.s32.totalorder 2, %s12
    // Predicated region
    $region53: #{trajectory_forward.1} parent=5 // pred_check
      %p600 = pneg %p599
    $region54: #{trajectory_forward.1} parent=5 // pred_check_branch
      %602 = sbr.rel (%p600) target = $region56
    $region55: #{trajectory_forward.1} parent=5 // pred_region
      %s603 = ssub.s32 %s12, 2
      // Predicated region
      $region57: #{trajectory_forward.1} parent=55 // pred_check
        %p604 = pneg %p188
      $region58: #{trajectory_forward.1} parent=55 // pred_check_branch
        %606 = sbr.rel (%p604) target = $region60
      $region59: #{trajectory_forward.1} parent=55 // pred_region
        %p607 = scmp.lt.s32.totalorder %s23, 1
        %s608 = scalar_select %p607, %s23, 1
        %p609 = scmp.lt.s32.totalorder %s24, 0
        %s610 = scalar_select %p609, %s24, 0
        %s611 = sadd.s32 %s610, %s608
        %s612 = smul.addr %s611, 8
        %s613 = scalar_lea.vmem %s6, %s612
      $region60: #{trajectory_forward.1} parent=55 // pred_fallthru
        _
    $region56: #{trajectory_forward.1} parent=5 // pred_fallthru
      _
  $region6: #{trajectory_forward.1} parent=0 // loop_footer
    %s16 = sadd.s32 1, %s12
  $region7: #{trajectory_forward.1} parent=0 // loop_footer_branch
    %11 = sbr.rel target = $region3
  $region8: #{trajectory_forward.1} parent=0 // loop_exit
    _

</llo_original>
